<compile_context>
chip_gen: v5e
topology: v5e:2x2
jax: 0.10.0
libtpu: 0.0.40
codegen_flags: <defaults>
</compile_context>

<pallas_src>
import jax
import jax.numpy as jnp
from jax.experimental import pallas as pl
from jax.experimental.pallas import tpu as pltpu

# Deterministic choice of conversion chain (module __init__ *conversions).
# Mirrors e.g. SimpleToModel(torch.half, torch.int32, torch.float32).
# TODO(synk): torch.half is substituted with bfloat16 (TPU-native); fp16 has
# 10 mantissa bits vs bf16's 8, so intermediate rounding can differ from a
# CPU/GPU fp16 reference for large magnitudes.
CONVERSIONS = (jnp.bfloat16, jnp.int32, jnp.float32)

LANES = 512        # lane-dense minor dim (multiple of 128)
TILE_ROWS = 512    # 512 x 512 x 4B = 1 MiB per f32 tile (x2 dbl-buf in + out)


def _to_chain_kernel(x_ref, o_ref):
    v = x_ref[...]
    for dt in CONVERSIONS:
        # torch .to(int) truncates toward zero; astype matches this on TPU.
        v = v.astype(dt)
    o_ref[...] = v


def to_chain(x):
    """Apply the chained dtype conversions of SimpleToModel via Pallas."""
    out_dtype = CONVERSIONS[-1]
    orig_shape = x.shape
    n = x.size

    flat = x.reshape(-1)

    # Rows after padding the minor dim to LANES.
    rows = pl.cdiv(n, LANES)

    # Pick a row tile: full extent for small inputs (legal block even if not
    # a multiple of 8, since it equals the full dim), otherwise TILE_ROWS and
    # pad rows so the grid divides evenly.
    if rows >= TILE_ROWS:
        tile_r = TILE_ROWS
        rows_padded = pl.cdiv(rows, tile_r) * tile_r
    else:
        tile_r = rows
        rows_padded = rows

    n_padded = rows_padded * LANES
    if n_padded != n:
        flat = jnp.pad(flat, (0, n_padded - n))
    x2d = flat.reshape(rows_padded, LANES)

    grid = (rows_padded // tile_r,)

    out2d = pl.pallas_call(
        _to_chain_kernel,
        out_shape=jax.ShapeDtypeStruct((rows_padded, LANES), out_dtype),
        grid=grid,
        in_specs=[pl.BlockSpec((tile_r, LANES), lambda i: (i, 0))],
        out_specs=pl.BlockSpec((tile_r, LANES), lambda i: (i, 0)),
        compiler_params=pltpu.CompilerParams(
            dimension_semantics=("parallel",)),
    )(x2d)

    out_flat = out2d.reshape(-1)
    if n_padded != n:
        out_flat = out_flat[:n]
    return out_flat.reshape(orig_shape)


if __name__ == "__main__":
    key = jax.random.PRNGKey(0)
    # NCHW input, small shape: batch=2, channels=4, spatial=16x16
    x = jax.random.normal(key, (2, 4, 16, 16), dtype=jnp.float32) * 5.0

    out = jax.block_until_ready(to_chain(x))

    # Pure-JAX reference of the same cast chain.
    ref = x
    for dt in CONVERSIONS:
        ref = ref.astype(dt)

    assert out.dtype == CONVERSIONS[-1]
    assert out.shape == x.shape
    assert jnp.array_equal(out, ref)

    print("KERNEL_OK")
</pallas_src>

<mosaic_0001>
module attributes {stable_mosaic.version = 11 : i64} {
  func.func @_to_chain_kernel(%arg0: i32, %arg1: memref<4x512xf32, #tpu.memory_space<vmem>>, %arg2: memref<4x512xf32, #tpu.memory_space<vmem>>) attributes {dimension_semantics = [#tpu.dimension_semantics<parallel>], iteration_bounds = array<i64: 1>, scalar_prefetch = 0 : i64, scratch_operands = 0 : i64, tpu.core_type = #tpu.core_type<tc>, window_params = [{transform_indices = @transform_0, window_bounds = array<i64: 4, 512>}, {transform_indices = @transform_1, window_bounds = array<i64: 4, 512>}]} {
    %c0 = arith.constant 0 : index
    %c0_0 = arith.constant 0 : index
    %0 = vector.load %arg1[%c0, %c0_0] : memref<4x512xf32, #tpu.memory_space<vmem>>, vector<4x512xf32>
    %1 = arith.truncf %0 : vector<4x512xf32> to vector<4x512xbf16>
    %2 = arith.fptosi %1 : vector<4x512xbf16> to vector<4x512xi32>
    %3 = arith.sitofp %2 : vector<4x512xi32> to vector<4x512xf32>
    %c0_1 = arith.constant 0 : index
    %c0_2 = arith.constant 0 : index
    %4 = vector.load %arg2[%c0_1, %c0_2] : memref<4x512xf32, #tpu.memory_space<vmem>>, vector<4x512xf32>
    tpu.vector_store %arg2[%c0_1, %c0_2], %3 {strides = array<i32>} : memref<4x512xf32, #tpu.memory_space<vmem>>, vector<4x512xf32>,
    return
  }
  func.func @transform_0(%arg0: i32) -> (i32, i32) {
    %c0_i32 = arith.constant 0 : i32
    %c0_i32_0 = arith.constant 0 : i32
    return %arg0, %c0_i32 : i32, i32
  }
  func.func @transform_1(%arg0: i32) -> (i32, i32) {
    %c0_i32 = arith.constant 0 : i32
    %c0_i32_0 = arith.constant 0 : i32
    return %arg0, %c0_i32 : i32, i32
  }
}

</mosaic_0001>

<llo_original>
// kernel: tpu_custom_call.1
$region0: #{tpu_custom_call.1}
  #allocation0 [shape = 'u32[]', space=smem, size = 0x4, offset = 0x4, fixed_abs, tag = 'smem constant byte address 0x4 - core index']
  #allocation1 [shape = 'u32[72,128]{1,0:T(1,128)}', space=vmem, size = 0x9000, scoped, tag = 'internal scratch']
  %s0 = inlined_call_operand.hbm [shape: f32[4,512], index: 0, kind: input, shape index: {}]
  %s1 = inlined_call_operand.hbm [shape: f32[4,512], index: 1, kind: output, shape index: {}]
  %s2 = sld [smem:[#allocation0]]
  $region18: #{tpu_custom_call.1} parent=0
    _
  %s4 = ssub.s32 1, %s2
  %s5 = scalar_select 0, %s4, %s2
  $region1: #{tpu_custom_call.1} parent=0
    #allocation2 [shape = 'u8[8192]{0}', space=vmem, size = 0x2000, scoped, tag = 'input window, operand 0, single buffered']
    #allocation3 [shape = 's32[1]{0}', space=sflag, size = 0x4, scoped, tag = 'scoped memory for tpu_custom_call.1']
    #allocation4 [shape = 's32[1]{0}', space=sflag, size = 0x4, scoped, tag = 'scoped memory for tpu_custom_call.1']
    #allocation5 [shape = 'u8[8192]{0}', space=vmem, size = 0x2000, scoped, tag = 'output window, operand 0, single buffered']
    %6 = vsyncpa [#allocation3], 0
    %7 = vsyncpa [#allocation4], 0
    // Predicated region
    $region2: #{tpu_custom_call.1} parent=1 // pred_check
      _
    $region3: #{tpu_custom_call.1} parent=1 // pred_check_branch
      %9 = sbr.rel (0) target = $region5
    $region4: #{tpu_custom_call.1} parent=1 // pred_region
      %11 = vsyncadd [#allocation3], 0
      %s13 = sshll.u32 %s0, 4
      %s14 = int_to_ptr.hbm [resolvable:$true] %s13
      %s15 = sshll.u32 [#allocation2], 4
      %s16 = int_to_ptr.vmem [resolvable:$true] %s15
      %18 = dma.hbm_to_vmem [thread:$0]  %s14, 256, %s16, [#allocation3]
    $region5: #{tpu_custom_call.1} parent=1 // pred_fallthru
      _
    // Predicated region
    $region6: #{tpu_custom_call.1} parent=1 // pred_check
      _
    $region7: #{tpu_custom_call.1} parent=1 // pred_check_branch
      %20 = sbr.rel (0) target = $region9
    $region8: #{tpu_custom_call.1} parent=1 // pred_region
      %22 = dma.done [#allocation3], 256
    $region9: #{tpu_custom_call.1} parent=1 // pred_fallthru
      _
    %v23 = vld [vmem:[#allocation2] sm:$0xff]
    %v24 = vld [vmem:[#allocation2 + $0x8] sm:$0xff]
    %27 = vst [vmem:[#allocation1] ss:$2 sm:$0xff] %v23
    %s28 = scalar_lea.vmem [#allocation1], 16
    %29 = vst [vmem:[%s28] ss:$2 sm:$0xff] %v24
    %v30 = vld.sshfl [vmem:[#allocation1] sm:$0xff pattern:$0x75316420]
    %v31 = vld.sshfl [vmem:[#allocation1 + $0x8] sm:$0xff pattern:$0x75316420]
    %v32 = vld.sshfl [vmem:[#allocation1 + $0x10] sm:$0xff pattern:$0x75316420]
    %v33 = vld.sshfl [vmem:[#allocation1 + $0x18] sm:$0xff pattern:$0x75316420]
    %v38 = vpack.c.bf16 %v31, %v30
    %v39 = vpack.c.bf16 %v33, %v32
    %v40 = vunpack.c.l.bf16 %v38
    %v41 = vunpack.c.h.bf16 %v38
    %v42 = vunpack.c.l.bf16 %v39
    %v43 = vunpack.c.h.bf16 %v39
    %v44 = vcvt.f32.s32.to.zero.pseudo %v40
    %v45 = vcvt.f32.s32.to.zero.pseudo %v41
    %v46 = vcvt.f32.s32.to.zero.pseudo %v42
    %v47 = vcvt.f32.s32.to.zero.pseudo %v43
    %v48 = vcvt.s32.f32 %v44
    %v49 = vcvt.s32.f32 %v45
    %v50 = vcvt.s32.f32 %v46
    %v51 = vcvt.s32.f32 %v47
    %v56 = vrot.slane %v49, 4
    %v57 = vrot.slane %v51, 4
    %vm58 = vcmask 1043456
    %v59 = vsel %vm58, %v48, %v56
    %v60 = vsel %vm58, %v50, %v57
    %63 = vst [vmem:[#allocation5] sm:$0xff] %v59
    %64 = vst [vmem:[#allocation5 + $0x8] sm:$0xff] %v60
    // Predicated region
    $region10: #{tpu_custom_call.1} parent=1 // pred_check
      _
    $region11: #{tpu_custom_call.1} parent=1 // pred_check_branch
      %66 = sbr.rel (0) target = $region13
    $region12: #{tpu_custom_call.1} parent=1 // pred_region
      %68 = vsyncadd [#allocation4], 0
      %s70 = sshll.u32 [#allocation5], 4
      %s71 = int_to_ptr.vmem [resolvable:$true] %s70
      %s72 = sshll.u32 %s1, 4
      %s73 = int_to_ptr.hbm [resolvable:$true] %s72
      %75 = dma.vmem_to_hbm [thread:$0]  %s71, 256, %s73, [#allocation4]
    $region13: #{tpu_custom_call.1} parent=1 // pred_fallthru
      _
    // Predicated region
    $region14: #{tpu_custom_call.1} parent=1 // pred_check
      _
    $region15: #{tpu_custom_call.1} parent=1 // pred_check_branch
      %77 = sbr.rel (0) target = $region17
    $region16: #{tpu_custom_call.1} parent=1 // pred_region
      %79 = dma.done [#allocation4], 256
    $region17: #{tpu_custom_call.1} parent=1 // pred_fallthru
      _
    %80 = vsyncpa [#allocation3], 1
    %81 = vsyncpa [#allocation4], 1

</llo_original>
